<compile_context>
chip_gen: v6e
topology: v6e:2x2x1
jax: 0.10.0
libtpu: 0.0.40
codegen_flags: <defaults>
</compile_context>

<pallas_src>
import jax
import jax.numpy as jnp
from jax.experimental import pallas as pl
from jax.experimental.pallas import tpu as pltpu


def _round_up(x, m):
    return ((x + m - 1) // m) * m


def _k_pad_target(k):
    """Lane/sublane-friendly padded contraction size (zero-padded, inert)."""
    if k % 128 == 0:
        return k
    if k < 256:
        return _round_up(k, 16)   # bf16 sublane packing of the weight
    return _round_up(k, 128)      # lane-dense patch loads, full MXU passes


def _vmem_capacity_bytes():
    """Physical per-core VMEM; conservative fallback if the query fails."""
    try:
        cap = getattr(pltpu.get_tpu_info(), "vmem_capacity_bytes", None)
        if cap:
            return int(cap)
    except Exception:
        pass
    return 64 << 20   # v7x physical size: a safe lower bound on every gen


def _patch_embed_kernel(p_ref, w_ref, b_ref, o_ref):
    # p_ref: (tile_m, K_pad), w_ref: (K_pad, tile_n), b_ref: (1, tile_n),
    # o_ref: (tile_m, tile_n).  f32 accumulation + f32 bias add on the MXU.
    acc = jnp.dot(p_ref[...], w_ref[...], preferred_element_type=jnp.float32)
    o_ref[...] = (acc + b_ref[...].astype(jnp.float32)).astype(o_ref.dtype)


def prepare_patch_embed_params(weight, bias, *, lane=128, compute_dtype=jnp.bfloat16):
    """Call-once parameter prep: Conv2d OIHW weight -> (K_pad, N_pad) matmul layout.

    weight: (embed_dim, C, p, p)   bias: (embed_dim,)
    K rows and N columns are zero-padded so all kernel loads/stores are
    lane-dense; the padding is mathematically inert and sliced off later.
    """
    embed_dim, C, ph, pw = weight.shape
    K = C * ph * pw
    k_pad = _k_pad_target(K)
    n_pad = _round_up(embed_dim, lane)

    w2d = weight.reshape(embed_dim, K).T                    # (K, embed_dim), (c, kh, kw) order
    if compute_dtype is not None:
        w2d = w2d.astype(compute_dtype)
    if (k_pad, n_pad) != (K, embed_dim):
        w2d = jnp.pad(w2d, ((0, k_pad - K), (0, n_pad - embed_dim)))

    b2d = bias.astype(jnp.float32).reshape(1, embed_dim)
    if n_pad != embed_dim:
        b2d = jnp.pad(b2d, ((0, 0), (0, n_pad - embed_dim)))
    return w2d, b2d


def patch_embed_prepared(x, w2d, b2d, patch_size, embed_dim, *,
                         compute_dtype=jnp.bfloat16, out_dtype=None,
                         max_tile_m=1024, max_tile_n=1024,
                         vmem_budget_bytes=None):
    """x: (B, C, H, W) NCHW;  w2d: (K_pad, N_pad);  b2d: (1, N_pad)."""
    B, C, H, W = x.shape
    p = patch_size
    assert H % p == 0 and W % p == 0, "image size must be divisible by patch size"
    Hg, Wg = H // p, W // p
    num_patches = Hg * Wg
    M = B * num_patches
    K = C * p * p
    k_pad, n_pad = w2d.shape
    assert k_pad == _k_pad_target(K) and n_pad == _round_up(embed_dim, 128)

    out_dtype = out_dtype if out_dtype is not None else x.dtype

    # ---- patch extraction glue.  Cast to the compute dtype FIRST so a
    #      materialized (M, K) intermediate is half the bytes; the K pad is a
    #      fusible last-dim pad of the transpose output. ----
    xc = x if (compute_dtype is None or x.dtype == compute_dtype) else x.astype(compute_dtype)
    patches = xc.reshape(B, C, Hg, p, Wg, p)
    patches = patches.transpose(0, 2, 4, 1, 3, 5)            # (B, Hg, Wg, C, p, p)
    patches = patches.reshape(B, Hg, Wg, K)
    if k_pad != K:
        patches = jnp.pad(patches, ((0, 0), (0, 0), (0, 0), (0, k_pad - K)))
    patches = patches.reshape(M, k_pad)                      # (M, K_pad)

    in_itemsize = jnp.dtype(patches.dtype).itemsize
    out_itemsize = jnp.dtype(out_dtype).itemsize

    # ---- per-generation VMEM budget + explicit scoped limit (v5e default is
    #      only 16 MiB; v7x has 64 MiB physical; v6e/v5e have 128 MiB). ----
    vmem_cap = _vmem_capacity_bytes()
    if vmem_budget_bytes is None:
        vmem_budget_bytes = min(vmem_cap // 2, 64 << 20)

    def vmem_bytes(tm, tn):
        return (2 * tm * k_pad * in_itemsize       # patches tile, double-buffered
                + 2 * k_pad * tn * in_itemsize     # weight tile, double-buffered
                + 2 * tn * 4                       # bias (f32)
                + 2 * tm * tn * out_itemsize)      # output tile, double-buffered

    # N tile first: keep the resident weight comfortably inside the budget so
    # tile_m never collapses for large embed dims (ViT-L/H/g).
    tile_n = min(n_pad, max_tile_n)
    while tile_n > 128 and vmem_bytes(8, tile_n) > vmem_budget_bytes // 2:
        tile_n = max(128, _round_up(tile_n // 2, 128))

    tile_m = min(max_tile_m, _round_up(M, 8))
    while tile_m > 8 and vmem_bytes(tile_m, tile_n) > vmem_budget_bytes:
        tile_m = max(8, _round_up(tile_m // 2, 8))

    grid = (pl.cdiv(M, tile_m), pl.cdiv(n_pad, tile_n))      # ragged blocks are masked
    vmem_limit = int(min(vmem_cap - (4 << 20),
                         max(2 * vmem_bytes(tile_m, tile_n), 32 << 20)))

    out = pl.pallas_call(
        _patch_embed_kernel,
        out_shape=jax.ShapeDtypeStruct((M, n_pad), out_dtype),
        grid_spec=pltpu.PrefetchScalarGridSpec(
            num_scalar_prefetch=0,
            grid=grid,
            in_specs=[
                pl.BlockSpec((tile_m, k_pad), lambda i, j: (i, 0)),
                pl.BlockSpec((k_pad, tile_n), lambda i, j: (0, j)),
                pl.BlockSpec((1, tile_n), lambda i, j: (0, j)),
            ],
            out_specs=pl.BlockSpec((tile_m, tile_n), lambda i, j: (i, j)),
        ),
        compiler_params=pltpu.CompilerParams(
            dimension_semantics=("parallel", "parallel"),     # v7x: shard over 2 TCs
            allow_input_fusion=[True, False, False],          # best-effort hint only
            vmem_limit_bytes=vmem_limit,
        ),
    )(patches, w2d, b2d)

    # Row count is exact (masked ragged last M block); only the embed_dim lane
    # padding needs to be dropped.
    out = out[:, :embed_dim]
    return out.reshape(B, num_patches, embed_dim)


def patch_embed(x, weight, bias, patch_size, *, compute_dtype=jnp.bfloat16,
                out_dtype=None, max_tile_m=1024, max_tile_n=1024):
    """Full PatchEmbed forward: proj(x).flatten(2).transpose(1, 2).
    norm_layer=None in the reference module -> nn.Identity(), so no norm here."""
    embed_dim = weight.shape[0]
    w2d, b2d = prepare_patch_embed_params(weight, bias, compute_dtype=compute_dtype)
    return patch_embed_prepared(x, w2d, b2d, patch_size, embed_dim,
                                compute_dtype=compute_dtype, out_dtype=out_dtype,
                                max_tile_m=max_tile_m, max_tile_n=max_tile_n)


if __name__ == "__main__":
    # Small shapes consistent with the module: img=16, patch=4, in_c=4, embed=32.
    B, C, H, W = 2, 4, 16, 16
    patch_size = 4
    embed_dim = 32

    key = jax.random.PRNGKey(0)
    kx, kw, kb = jax.random.split(key, 3)
    x = jax.random.normal(kx, (B, C, H, W), dtype=jnp.float32)
    # Deterministic synthetic Conv2d parameters (same shapes as nn.Conv2d).
    weight = jax.random.normal(kw, (embed_dim, C, patch_size, patch_size),
                               dtype=jnp.float32) * 0.02
    bias = jax.random.normal(kb, (embed_dim,), dtype=jnp.float32) * 0.02

    # Reference: plain-JAX conv (same semantics as nn.Conv2d stride=kernel).
    ref = jax.lax.conv_general_dilated(
        x, weight, window_strides=(patch_size, patch_size), padding="VALID",
        dimension_numbers=("NCHW", "OIHW", "NCHW"))
    ref = ref + bias.reshape(1, embed_dim, 1, 1)
    ref = ref.reshape(B, embed_dim, -1).transpose(0, 2, 1)    # flatten(2).transpose(1,2)

    n_tok = (H // patch_size) * (W // patch_size)

    # f32-operand path: tight-tolerance correctness check.
    out_f32 = jax.block_until_ready(
        patch_embed(x, weight, bias, patch_size, compute_dtype=jnp.float32))
    assert out_f32.shape == (B, n_tok, embed_dim)
    assert jnp.allclose(out_f32, ref, atol=1e-4, rtol=1e-4)

    # Default path: bf16 MXU operands, f32 accumulation, f32 output.
    out = jax.block_until_ready(patch_embed(x, weight, bias, patch_size))
    assert out.shape == (B, n_tok, embed_dim)
    assert jnp.allclose(out, ref, atol=5e-2, rtol=5e-2)

    # v7x-recommended path: bf16 in, bf16 out (downstream ViT in bf16).
    out_bf16 = jax.block_until_ready(
        patch_embed(x, weight, bias, patch_size, out_dtype=jnp.bfloat16))
    assert out_bf16.dtype == jnp.bfloat16
    assert jnp.allclose(out_bf16.astype(jnp.float32), ref, atol=7e-2, rtol=7e-2)

    print("KERNEL_OK")
</pallas_src>

<mosaic_0001>
module attributes {stable_mosaic.version = 11 : i64} {
  func.func @_patch_embed_kernel(%arg0: i32, %arg1: i32, %arg2: memref<32x64xf32, #tpu.memory_space<vmem>>, %arg3: memref<64x128xf32, #tpu.memory_space<vmem>>, %arg4: memref<1x128xf32, #tpu.memory_space<vmem>>, %arg5: memref<32x128xf32, #tpu.memory_space<vmem>>) attributes {dimension_semantics = [#tpu.dimension_semantics<parallel>, #tpu.dimension_semantics<parallel>], iteration_bounds = array<i64: 1, 1>, scalar_prefetch = 0 : i64, scratch_operands = 0 : i64, tpu.core_type = #tpu.core_type<tc>, window_params = [{transform_indices = @transform_0, window_bounds = array<i64: 32, 64>}, {transform_indices = @transform_1, window_bounds = array<i64: 64, 128>}, {transform_indices = @transform_2, window_bounds = array<i64: 1, 128>}, {transform_indices = @transform_3, window_bounds = array<i64: 32, 128>}]} {
    %c0 = arith.constant 0 : index
    %c0_0 = arith.constant 0 : index
    %0 = vector.load %arg2[%c0, %c0_0] : memref<32x64xf32, #tpu.memory_space<vmem>>, vector<32x64xf32>
    %c0_1 = arith.constant 0 : index
    %c0_2 = arith.constant 0 : index
    %1 = vector.load %arg3[%c0_1, %c0_2] : memref<64x128xf32, #tpu.memory_space<vmem>>, vector<64x128xf32>
    %cst = arith.constant dense<0.000000e+00> : vector<32x128xf32>
    %2 = tpu.matmul %0, %1, %cst {dimension_numbers = #tpu.dot_dimension_numbers<[1], [0], [0], [1], [0, 0, 1, 1], [], []>} : vector<32x64xf32>, vector<64x128xf32>, vector<32x128xf32> -> vector<32x128xf32>
    %c0_3 = arith.constant 0 : index
    %c0_4 = arith.constant 0 : index
    %3 = vector.load %arg4[%c0_3, %c0_4] : memref<1x128xf32, #tpu.memory_space<vmem>>, vector<1x128xf32>
    %4 = vector.broadcast %3 : vector<1x128xf32> to vector<32x128xf32>
    %5 = arith.addf %2, %4 : vector<32x128xf32>
    %c0_5 = arith.constant 0 : index
    %c0_6 = arith.constant 0 : index
    %6 = vector.load %arg5[%c0_5, %c0_6] : memref<32x128xf32, #tpu.memory_space<vmem>>, vector<32x128xf32>
    tpu.vector_store %arg5[%c0_5, %c0_6], %5 {strides = array<i32>} : memref<32x128xf32, #tpu.memory_space<vmem>>, vector<32x128xf32>,
    return
  }
  func.func @transform_0(%arg0: i32, %arg1: i32) -> (i32, i32) {
    %c0_i32 = arith.constant 0 : i32
    %c0_i32_0 = arith.constant 0 : i32
    return %arg0, %c0_i32 : i32, i32
  }
  func.func @transform_1(%arg0: i32, %arg1: i32) -> (i32, i32) {
    %c0_i32 = arith.constant 0 : i32
    %c0_i32_0 = arith.constant 0 : i32
    return %c0_i32, %arg1 : i32, i32
  }
  func.func @transform_2(%arg0: i32, %arg1: i32) -> (i32, i32) {
    %c0_i32 = arith.constant 0 : i32
    %c0_i32_0 = arith.constant 0 : i32
    return %c0_i32, %arg1 : i32, i32
  }
  func.func @transform_3(%arg0: i32, %arg1: i32) -> (i32, i32) {
    %c0_i32 = arith.constant 0 : i32
    return %arg0, %arg1 : i32, i32
  }
}

</mosaic_0001>

<llo_original>
// kernel: tpu_custom_call.1
$region0: #{tpu_custom_call.1}
  #allocation0 [shape = 'u32[]', space=smem, size = 0x4, offset = 0x4, fixed_abs, tag = 'smem constant byte address 0x4 - core index']
  #allocation1 [shape = 'u32[144,128]{1,0:T(1,128)}', space=vmem, size = 0x12000, scoped, tag = 'internal scratch']
  %s0 = inlined_call_operand.hbm [shape: f32[32,64], index: 0, kind: input, shape index: {}]
  %s1 = inlined_call_operand.hbm [shape: f32[64,128], index: 1, kind: input, shape index: {}]
  %s2 = inlined_call_operand.vmem [shape: f32[1,128], index: 2, kind: input, shape index: {}]
  %s3 = inlined_call_operand.hbm [shape: f32[32,128], index: 3, kind: output, shape index: {}]
  %s4 = sld [smem:[#allocation0]]
  $region30: #{tpu_custom_call.1} parent=0
    _
  %s6 = ssub.s32 1, %s4
  %s7 = scalar_select 0, %s6, %s4
  $region1: #{tpu_custom_call.1} parent=0
    #allocation2 [shape = 'u8[16384]{0}', space=vmem, size = 0x4000, scoped, tag = 'input window, operand 0, single buffered']
    #allocation3 [shape = 's32[1]{0}', space=sflag, size = 0x4, scoped, tag = 'scoped memory for tpu_custom_call.1']
    #allocation4 [shape = 's32[1]{0}', space=sflag, size = 0x4, scoped, tag = 'scoped memory for tpu_custom_call.1']
    #allocation5 [shape = 'u8[32768]{0}', space=vmem, size = 0x8000, scoped, tag = 'input window, operand 1, single buffered']
    #allocation6 [shape = 's32[1]{0}', space=sflag, size = 0x4, scoped, tag = 'scoped memory for tpu_custom_call.1']
    #allocation7 [shape = 'u8[16384]{0}', space=vmem, size = 0x4000, scoped, tag = 'output window, operand 0, single buffered']
    %8 = vsyncpa [#allocation3], 0
    %9 = vsyncpa [#allocation6], 0
    %10 = vsyncpa [#allocation4], 0
    // Predicated region
    $region2: #{tpu_custom_call.1} parent=1 // pred_check
      _
    $region3: #{tpu_custom_call.1} parent=1 // pred_check_branch
      %12 = sbr.rel (0) target = $region5
    $region4: #{tpu_custom_call.1} parent=1 // pred_region
      %s14 = ssub.s32 512, 512
      %15 = vsyncadd [#allocation3], %s14
      %s16 = sshll.u32 [#allocation2], 4
      %s17 = int_to_ptr.vmem [resolvable:$true] %s16
      %22 = dma.hbm_to_vmem [thread:$0]  %s0, 512, %s17, [#allocation3], 128, 128, 8
    $region5: #{tpu_custom_call.1} parent=1 // pred_fallthru
      _
    // Predicated region
    $region6: #{tpu_custom_call.1} parent=1 // pred_check
      _
    $region7: #{tpu_custom_call.1} parent=1 // pred_check_branch
      %24 = sbr.rel (0) target = $region9
    $region8: #{tpu_custom_call.1} parent=1 // pred_region
      %s26 = ssub.s32 1024, 1024
      %27 = vsyncadd [#allocation6], %s26
      %s28 = sshll.u32 [#allocation5], 4
      %s29 = int_to_ptr.vmem [resolvable:$true] %s28
      %34 = dma.hbm_to_vmem [thread:$0]  %s1, 1024, %s29, [#allocation6], 128, 128, 8
    $region9: #{tpu_custom_call.1} parent=1 // pred_fallthru
      _
    // Predicated region
    $region10: #{tpu_custom_call.1} parent=1 // pred_check
      _
    $region11: #{tpu_custom_call.1} parent=1 // pred_check_branch
      %36 = sbr.rel (0) target = $region13
    $region12: #{tpu_custom_call.1} parent=1 // pred_region
      _
    $region13: #{tpu_custom_call.1} parent=1 // pred_fallthru
      _
    // Predicated region
    $region14: #{tpu_custom_call.1} parent=1 // pred_check
      _
    $region15: #{tpu_custom_call.1} parent=1 // pred_check_branch
      %38 = sbr.rel (0) target = $region17
    $region16: #{tpu_custom_call.1} parent=1 // pred_region
      %39 = dma.done [#allocation3], 512
    $region17: #{tpu_custom_call.1} parent=1 // pred_fallthru
      _
    // Predicated region
    $region18: #{tpu_custom_call.1} parent=1 // pred_check
      _
    $region19: #{tpu_custom_call.1} parent=1 // pred_check_branch
      %41 = sbr.rel (0) target = $region21
    $region20: #{tpu_custom_call.1} parent=1 // pred_region
      %42 = dma.done [#allocation6], 1024
    $region21: #{tpu_custom_call.1} parent=1 // pred_fallthru
      _
    %v43 = vld [vmem:[#allocation2] sm:$0xff]
    %v44 = vld [vmem:[#allocation2 + $0x8] sm:$0xff]
    %v45 = vld [vmem:[#allocation2 + $0x10] sm:$0xff]
    %v46 = vld [vmem:[#allocation2 + $0x18] sm:$0xff]
    %v47 = vld [vmem:[#allocation5] sm:$0xff]
    %v48 = vld [vmem:[#allocation5 + $0x8] sm:$0xff]
    %v49 = vld [vmem:[#allocation5 + $0x10] sm:$0xff]
    %v50 = vld [vmem:[#allocation5 + $0x18] sm:$0xff]
    %v51 = vld [vmem:[#allocation5 + $0x20] sm:$0xff]
    %v52 = vld [vmem:[#allocation5 + $0x28] sm:$0xff]
    %v53 = vld [vmem:[#allocation5 + $0x30] sm:$0xff]
    %v54 = vld [vmem:[#allocation5 + $0x38] sm:$0xff]
    %v55 = vld [vmem:[%s2] sm:$0x1]
    %v57 = vlaneseq
    %v58 = vshrl.u32 %v57, 7
    %v59 = vsub.s32 0, %v58
    %v60 = vrot.slane %v55, %v59
    %vm62 = vcmask 523264
    %v64 = vsel %vm62, %v43, 0
    %v67 = vsel %vm62, %v44, 0
    %v70 = vsel %vm62, %v45, 0
    %v73 = vsel %vm62, %v46, 0
    %75 = vmatprep.subr.mxu0 0.0
    %76 = vmatpush1.msra.mxu0 0.0
    %77 = vmatprep.subr.mxu0 0.0
    %78 = vmatpush1.msra.mxu0 0.0
    %79 = vmatprep.subr.mxu0 0.0
    %80 = vmatpush1.msra.mxu0 0.0
    %81 = vmatprep.subr.mxu0 0.0
    %82 = vmatpush1.msra.mxu0 0.0
    %83 = vmatprep.subr.mxu0 0.0
    %84 = vmatpush1.msra.mxu0 0.0
    %85 = vmatprep.subr.mxu0 0.0
    %86 = vmatpush1.msra.mxu0 0.0
    %87 = vmatprep.subr.mxu0 0.0
    %88 = vmatpush1.msra.mxu0 0.0
    %89 = vmatprep.subr.mxu0 0.0
    %90 = vmatpush1.msra.mxu0 0.0
    %91 = vmatprep.subr.mxu0 0.0
    %92 = vmatpush1.msra.mxu0 %v54
    %93 = vmatprep.subr.mxu0 0.0
    %94 = vmatpush1.msra.mxu0 %v53
    %95 = vmatprep.subr.mxu0 0.0
    %96 = vmatpush1.msra.mxu0 %v52
    %97 = vmatprep.subr.mxu0 0.0
    %98 = vmatpush1.msra.mxu0 %v51
    %99 = vmatprep.subr.mxu0 0.0
    %100 = vmatpush1.msra.mxu0 %v50
    %101 = vmatprep.subr.mxu0 0.0
    %102 = vmatpush1.msra.mxu0 %v49
    %103 = vmatprep.subr.mxu0 0.0
    %104 = vmatpush1.msra.mxu0 %v48
    %105 = vmatprep.subr.mxu0 0.0
    %106 = vmatpush1.msra.mxu0 %v47
    %107 = vmatprep.subr.mxu0 0.0
    %108 = vmatpush2.msra.mxu0 0.0
    %109 = vmatprep.subr.mxu0 0.0
    %110 = vmatpush2.msra.mxu0 0.0
    %111 = vmatprep.subr.mxu0 0.0
    %112 = vmatpush2.msra.mxu0 0.0
    %113 = vmatprep.subr.mxu0 0.0
    %114 = vmatpush2.msra.mxu0 0.0
    %115 = vmatprep.subr.mxu0 0.0
    %116 = vmatpush2.msra.mxu0 0.0
    %117 = vmatprep.subr.mxu0 0.0
    %118 = vmatpush2.msra.mxu0 0.0
    %119 = vmatprep.subr.mxu0 0.0
    %120 = vmatpush2.msra.mxu0 0.0
    %121 = vmatprep.subr.mxu0 0.0
    %122 = vmatpush2.msra.mxu0 0.0
    %123 = vmatprep.subr.mxu0 0.0
    %124 = vmatpush2.msra.mxu0 0.0
    %125 = vmatprep.subr.mxu0 0.0
    %126 = vmatpush2.msra.mxu0 0.0
    %127 = vmatprep.subr.mxu0 0.0
    %128 = vmatpush2.msra.mxu0 0.0
    %129 = vmatprep.subr.mxu0 0.0
    %130 = vmatpush2.msra.mxu0 0.0
    %131 = vmatprep.subr.mxu0 0.0
    %132 = vmatpush2.msra.mxu0 0.0
    %133 = vmatprep.subr.mxu0 0.0
    %134 = vmatpush2.msra.mxu0 0.0
    %135 = vmatprep.subr.mxu0 0.0
    %136 = vmatpush2.msra.mxu0 0.0
    %137 = vmatprep.subr.mxu0 0.0
    %138 = vmatpush2.msra.mxu0 0.0
    %139 = vmatprep.mubr.f32.mxu0 0.0
    %140 = vmatmul.mubr.f32.gmra.mxu0 %v64
    %v141 = vpop.f32.mrf.mxu0
    %v142 = vadd.f32 %v60, %v141
    %v143 = vpop.f32.mrf.mxu0
    %144 = vmatprep.mubr.f32.mxu0 0.0
    %145 = vmatmul.mubr.f32.gmra.mxu0 %v67
    %v146 = vpop.f32.mrf.mxu0
    %v147 = vadd.f32 %v60, %v146
    %v148 = vpop.f32.mrf.mxu0
    %149 = vmatprep.mubr.f32.mxu0 0.0
    %150 = vmatmul.mubr.f32.gmra.mxu0 %v70
    %v151 = vpop.f32.mrf.mxu0
    %v152 = vadd.f32 %v60, %v151
    %v153 = vpop.f32.mrf.mxu0
    %154 = vmatprep.mubr.f32.mxu0 0.0
    %155 = vmatmul.mubr.f32.gmra.mxu0 %v73
    %v156 = vpop.f32.mrf.mxu0
    %v157 = vadd.f32 %v60, %v156
    %v158 = vpop.f32.mrf.mxu0
    %159 = vdwg.mxu0
    %160 = vst [vmem:[#allocation7] sm:$0xff] %v142
    %161 = vst [vmem:[#allocation7 + $0x8] sm:$0xff] %v147
    %162 = vst [vmem:[#allocation7 + $0x10] sm:$0xff] %v152
    %163 = vst [vmem:[#allocation7 + $0x18] sm:$0xff] %v157
    // Predicated region
    $region22: #{tpu_custom_call.1} parent=1 // pred_check
      _
    $region23: #{tpu_custom_call.1} parent=1 // pred_check_branch
      %165 = sbr.rel (0) target = $region25
    $region24: #{tpu_custom_call.1} parent=1 // pred_region
      %s167 = ssub.s32 512, 512
      %168 = vsyncadd [#allocation4], %s167
      %s169 = sshll.u32 [#allocation7], 4
      %s170 = int_to_ptr.vmem [resolvable:$true] %s169
      %175 = dma.vmem_to_hbm [thread:$0]  %s170, 512, %s3, [#allocation4], 128, 128, 8
    $region25: #{tpu_custom_call.1} parent=1 // pred_fallthru
      _
    // Predicated region
    $region26: #{tpu_custom_call.1} parent=1 // pred_check
      _
    $region27: #{tpu_custom_call.1} parent=1 // pred_check_branch
      %177 = sbr.rel (0) target = $region29
    $region28: #{tpu_custom_call.1} parent=1 // pred_region
      %178 = dma.done [#allocation4], 512
    $region29: #{tpu_custom_call.1} parent=1 // pred_fallthru
      _
    %179 = vsyncpa [#allocation3], 1
    %180 = vsyncpa [#allocation6], 1
    %181 = vsyncpa [#allocation4], 1

</llo_original>
